<compile_context>
chip_gen: v6e
topology: v6e:2x2x1
jax: 0.10.0
libtpu: 0.0.40
codegen_flags: <defaults>
</compile_context>

<pallas_src>
import functools
import inspect
from typing import List

import jax
import jax.numpy as jnp
from jax.experimental import pallas as pl
from jax.experimental.pallas import tpu as pltpu

LANE = 128
SUBLANE = 8

try:
    _HAS_PIPELINE_MODE = ("pipeline_mode"
                          in inspect.signature(pl.BlockSpec).parameters)
except (TypeError, ValueError):
    _HAS_PIPELINE_MODE = False


def _round_up(x: int, m: int) -> int:
    return ((x + m - 1) // m) * m


def _device_kind() -> str:
    try:
        return jax.devices()[0].device_kind.lower()
    except Exception:  # pragma: no cover - defensive
        return ""


def _vmem_budget_bytes() -> int:
    """Usable VMEM budget for this kernel, per TPU generation."""
    if "v7" in _device_kind():
        return 48 * 1024 * 1024        # v7x: 64 MiB physical per TensorCore
    return 100 * 1024 * 1024           # v5e / v6e: 128 MiB physical


def _const_block_spec(shape, single_buffer: bool):
    """Full-extent, grid-invariant block (weights / biases)."""
    if single_buffer and _HAS_PIPELINE_MODE and hasattr(pl, "Buffered"):
        return pl.BlockSpec(shape, lambda i: (0, 0),
                            pipeline_mode=pl.Buffered(1))
    return pl.BlockSpec(shape, lambda i: (0, 0))


# ---------------------------------------------------------------------------
# Fused kernel: chain of (matmul + bias [+ ReLU]) over one batch tile
# ---------------------------------------------------------------------------
def _fused_mlp_kernel(*refs, n_layers: int, relu_flags, use_bf16: bool):
    # refs = (x_ref, w1_ref, b1_ref, ..., wN_ref, bN_ref, o_ref)
    x_ref = refs[0]
    o_ref = refs[-1]

    h = x_ref[...]
    if use_bf16:
        if h.dtype != jnp.bfloat16:
            h = h.astype(jnp.bfloat16)       # MXU operands in bf16
    else:
        if h.dtype != jnp.float32:
            h = h.astype(jnp.float32)

    for i in range(n_layers):
        w = refs[1 + 2 * i][...]             # (fin_pad, fout_pad), pre-cast
        b = refs[2 + 2 * i][...]             # (1, fout_pad), f32
        acc = jnp.dot(h, w, preferred_element_type=jnp.float32) + b
        if relu_flags[i]:
            acc = jnp.maximum(acc, 0.0)      # elementwise stays f32 (v5e-safe)
        if i + 1 < n_layers:
            h = acc.astype(jnp.bfloat16) if use_bf16 else acc
        else:
            o_ref[...] = acc.astype(o_ref.dtype)


def _fused_call(x_pad, params, relu_flags, use_bf16, out_dtype, tb, grid,
                fout_pad, vmem_limit, single_buffer_weights):
    n_layers = len(params)
    fin_pad = params[0][0].shape[0]
    kernel = functools.partial(_fused_mlp_kernel, n_layers=n_layers,
                               relu_flags=relu_flags, use_bf16=use_bf16)

    in_specs = [pl.BlockSpec((tb, fin_pad), lambda i: (i, 0))]
    flat_inputs = [x_pad]
    for (w_t, bias) in params:
        fi, fo = w_t.shape
        in_specs.append(_const_block_spec((fi, fo), single_buffer_weights))
        in_specs.append(_const_block_spec((1, fo), single_buffer_weights))
        flat_inputs.append(w_t)
        flat_inputs.append(bias)

    return pl.pallas_call(
        kernel,
        out_shape=jax.ShapeDtypeStruct((x_pad.shape[0], fout_pad), out_dtype),
        grid=grid,
        in_specs=in_specs,
        out_specs=pl.BlockSpec((tb, fout_pad), lambda i: (i, 0)),
        compiler_params=pltpu.CompilerParams(
            dimension_semantics=("parallel",),
            vmem_limit_bytes=int(vmem_limit)),
    )(*flat_inputs)


# ---------------------------------------------------------------------------
# Fallback: per-layer tiled matmul + bias (+ ReLU) when weights don't fit VMEM
# ---------------------------------------------------------------------------
def _layer_kernel(x_ref, w_ref, b_ref, o_ref, acc_ref, *, relu: bool):
    @pl.when(pl.program_id(2) == 0)
    def _():
        acc_ref[...] = jnp.zeros_like(acc_ref)

    acc_ref[...] += jnp.dot(x_ref[...], w_ref[...],
                            preferred_element_type=jnp.float32)

    @pl.when(pl.program_id(2) == pl.num_programs(2) - 1)
    def _():
        r = acc_ref[...] + b_ref[...]
        if relu:
            r = jnp.maximum(r, 0.0)
        o_ref[...] = r.astype(o_ref.dtype)


def _pick_tile(total: int, candidates) -> int:
    for c in candidates:
        if total % c == 0:
            return c
    return total  # full extent (allowed by the (8,128) rule)


def _linear_layer_pallas(x, w_t, b, relu, out_dtype, vmem_limit):
    B, K = x.shape
    _, N = w_t.shape
    b_pad = _round_up(max(B, 1), SUBLANE)
    tb = min(b_pad, 256)
    b_pad = _round_up(b_pad, tb)
    if b_pad != B:
        x = jnp.pad(x, ((0, b_pad - B), (0, 0)))
    tn = _pick_tile(N, (256, 128))
    tk = _pick_tile(K, (512, 256, 128))
    grid = (b_pad // tb, N // tn, K // tk)

    out = pl.pallas_call(
        functools.partial(_layer_kernel, relu=relu),
        out_shape=jax.ShapeDtypeStruct((b_pad, N), out_dtype),
        grid=grid,
        in_specs=[pl.BlockSpec((tb, tk), lambda i, j, k: (i, k)),
                  pl.BlockSpec((tk, tn), lambda i, j, k: (k, j)),
                  pl.BlockSpec((1, tn), lambda i, j, k: (0, j))],
        out_specs=pl.BlockSpec((tb, tn), lambda i, j, k: (i, j)),
        scratch_shapes=[pltpu.VMEM((tb, tn), jnp.float32)],
        compiler_params=pltpu.CompilerParams(
            dimension_semantics=("parallel", "parallel", "arbitrary"),
            vmem_limit_bytes=int(vmem_limit)),
    )(x, w_t, b)
    return out[:B]


def _mlp_unfused(x, params, relu_flags, use_bf16, out_dtype, vmem_limit):
    n = len(params)
    h = x
    for i, (w_t, bias) in enumerate(params):
        lhs = h.astype(jnp.bfloat16) if use_bf16 else h.astype(jnp.float32)
        inter_dtype = ((jnp.bfloat16 if use_bf16 else jnp.float32)
                       if i + 1 < n else out_dtype)
        h = _linear_layer_pallas(lhs, w_t, bias, relu_flags[i], inter_dtype,
                                 vmem_limit)
    return h


# ---------------------------------------------------------------------------
# Forward wrapper
# ---------------------------------------------------------------------------
def mlp_forward(x, params, non_linearity_last, *, in_features, out_features,
                use_bf16=True, max_batch_tile=None, force_unfused=False):
    B, F = x.shape
    assert F == in_features, f"expected {in_features} input features, got {F}"
    n_layers = len(params)
    fin_pad = params[0][0].shape[0]
    widths_pad = [w.shape[1] for (w, _) in params]
    fout_pad = widths_pad[-1]
    relu_flags = tuple((i < n_layers - 1) or non_linearity_last
                       for i in range(n_layers))
    out_dtype = x.dtype

    budget = _vmem_budget_bytes()
    weight_bytes = sum(w.size * w.dtype.itemsize + b.size * b.dtype.itemsize
                       for (w, b) in params)

    # Zero-pad the feature dim of x to the (padded) in-dim of the first layer.
    if F != fin_pad:
        x = jnp.pad(x, ((0, 0), (0, fin_pad - F)))

    # --- fallback: weights too big to stay VMEM-resident in the fused kernel
    if force_unfused or weight_bytes > budget // 3:
        vmem_limit = min(budget, 64 << 20)
        out = _mlp_unfused(x, params, relu_flags, use_bf16, out_dtype,
                           vmem_limit)
        return out[:, :out_features]

    # --- fused path: derive the batch tile from an explicit VMEM budget
    xbytes = x.dtype.itemsize
    maxw = max(widths_pad)
    per_row = (2 * fin_pad * xbytes          # x double buffer
               + 2 * fout_pad * xbytes       # output double buffer
               + 3 * maxw * 4)               # live f32 intermediates
    margin = 2 << 20
    avail = budget - weight_bytes - margin
    tb_vmem = max(SUBLANE, (max(avail, 0) // per_row) // SUBLANE * SUBLANE)

    if max_batch_tile is None:
        narrow = max(fin_pad, maxw) <= LANE
        if narrow:
            max_batch_tile = 4096 if "v7" in _device_kind() else 2048
        else:
            max_batch_tile = 512

    b_pad0 = _round_up(max(B, 1), SUBLANE)
    tb = min(max_batch_tile, tb_vmem)
    if tb >= b_pad0:
        # Guarantee >= 2 grid steps when possible so both v7x cores get work.
        tb = (_round_up(-(-b_pad0 // 2), SUBLANE)
              if b_pad0 >= 2 * SUBLANE else b_pad0)
    b_pad = _round_up(b_pad0, tb)
    if b_pad != B:
        x = jnp.pad(x, ((0, b_pad - B), (0, 0)))
    grid = (b_pad // tb,)

    vmem_need = 2 * weight_bytes + per_row * tb + margin
    vmem_limit = max(16 << 20, min(budget, vmem_need))

    try:
        out = _fused_call(x, params, relu_flags, use_bf16, out_dtype, tb, grid,
                          fout_pad, vmem_limit, single_buffer_weights=True)
    except Exception:
        # Older JAX / Mosaic without single-buffer pipeline_mode support.
        out = _fused_call(x, params, relu_flags, use_bf16, out_dtype, tb, grid,
                          fout_pad, vmem_limit, single_buffer_weights=False)

    return out[:B, :out_features]


# ---------------------------------------------------------------------------
# Parameter init (mirrors make_fc_layer: orthogonal W, zero b)
# ---------------------------------------------------------------------------
def orthogonal_init(key, shape):
    """Orthogonal init for a (out_features, in_features) weight matrix."""
    rows, cols = shape
    flat = jax.random.normal(key, (max(rows, cols), min(rows, cols)),
                             dtype=jnp.float32)
    q, r = jnp.linalg.qr(flat)
    q = q * jnp.sign(jnp.diag(r))
    if rows < cols:
        q = q.T
    return q[:rows, :cols]


class MLP:
    """Pallas re-implementation of the PyTorch MLP module (fused forward).

    fc_feat_dim_list[0]  = in_features of the first linear layer
    fc_feat_dim_list[1:] = out_features of each linear layer
    ReLU after every layer except the last (unless non_linearity_last=True).
    """

    def __init__(self, fc_feat_dim_list: List[int], name: str,
                 non_linearity_last: bool = False, seed: int = 0,
                 use_bf16_matmul: bool = True):
        self.name = name
        self.dims = list(fc_feat_dim_list)
        self.non_linearity_last = non_linearity_last
        self.use_bf16_matmul = use_bf16_matmul
        self.in_features = fc_feat_dim_list[0]
        self.out_features = fc_feat_dim_list[-1]

        self.params = []       # padded, pre-transposed (and pre-cast) weights
        self.ref_params = []   # original (out, in) f32 weights, for reference
        key = jax.random.PRNGKey(seed)
        n_layers = len(fc_feat_dim_list) - 1
        prev_pad = _round_up(self.in_features, SUBLANE)
        for i in range(n_layers):
            key, wkey = jax.random.split(key)
            fin, fout = fc_feat_dim_list[i], fc_feat_dim_list[i + 1]
            fin_pad = prev_pad
            fout_pad = _round_up(fout, LANE)
            w = orthogonal_init(wkey, (fout, fin))      # PyTorch layout (out, in)
            self.ref_params.append((w, jnp.zeros((fout,), jnp.float32)))
            # Pre-transpose to (in, out), zero-pad to (fin_pad, fout_pad),
            # pre-cast to bf16 once (no per-grid-step cast in the kernel).
            w_t = jnp.zeros((fin_pad, fout_pad), jnp.float32)
            w_t = w_t.at[:fin, :fout].set(w.T)
            if use_bf16_matmul:
                w_t = w_t.astype(jnp.bfloat16)
            bias = jnp.zeros((1, fout_pad), jnp.float32)
            self.params.append((w_t, bias))
            prev_pad = fout_pad

    def __call__(self, x, *, force_unfused: bool = False,
                 max_batch_tile=None):
        return mlp_forward(x, self.params, self.non_linearity_last,
                           in_features=self.in_features,
                           out_features=self.out_features,
                           use_bf16=self.use_bf16_matmul,
                           max_batch_tile=max_batch_tile,
                           force_unfused=force_unfused)


# ---------------------------------------------------------------------------
# Pure-JAX reference (unpadded f32 weights)
# ---------------------------------------------------------------------------
def mlp_ref(x, ref_params, non_linearity_last):
    n = len(ref_params)
    h = x.astype(jnp.float32)
    for i, (w, b) in enumerate(ref_params):
        h = h @ w.T + b
        if (i < n - 1) or non_linearity_last:
            h = jnp.maximum(h, 0.0)
    return h


if __name__ == "__main__":
    batch = 8
    dims = [32, 64, 64, 16]
    key = jax.random.PRNGKey(0)
    x = jax.random.normal(key, (batch, dims[0]), dtype=jnp.float32)

    # f32 MXU operands: tight tolerance vs reference.
    mlp_f32 = MLP(dims, name="f32", non_linearity_last=False, seed=0,
                  use_bf16_matmul=False)
    out = jax.block_until_ready(mlp_f32(x))
    ref = mlp_ref(x, mlp_f32.ref_params, False)
    assert out.shape == (batch, dims[-1])
    assert jnp.allclose(out, ref, atol=1e-4, rtol=1e-4), "f32 mismatch"

    # Default bf16 MXU operands (f32 accumulation): looser tolerance.
    mlp_bf16 = MLP(dims, name="bf16", non_linearity_last=False, seed=0)
    out_b = jax.block_until_ready(mlp_bf16(x))
    ref_b = mlp_ref(x, mlp_bf16.ref_params, False)
    assert out_b.shape == (batch, dims[-1])
    assert jnp.allclose(out_b, ref_b, atol=2e-2, rtol=2e-2), "bf16 mismatch"

    # Batch not a multiple of the tile -> padding path + >=2 grid steps.
    x2 = jax.random.normal(jax.random.PRNGKey(1), (13, dims[0]),
                           dtype=jnp.float32)
    out2 = jax.block_until_ready(mlp_f32(x2))
    ref2 = mlp_ref(x2, mlp_f32.ref_params, False)
    assert out2.shape == (13, dims[-1])
    assert jnp.allclose(out2, ref2, atol=1e-4, rtol=1e-4), "padded mismatch"

    # Unfused (per-layer tiled matmul) fallback path, normally used only when
    # the weights exceed ~1/3 of the per-generation VMEM budget.
    out3 = jax.block_until_ready(mlp_f32(x2, force_unfused=True))
    assert jnp.allclose(out3, ref2, atol=1e-4, rtol=1e-4), "unfused mismatch"

    # non_linearity_last=True variant.
    mlp_nl = MLP(dims, name="nl", non_linearity_last=True, seed=1,
                 use_bf16_matmul=False)
    out4 = jax.block_until_ready(mlp_nl(x))
    ref4 = mlp_ref(x, mlp_nl.ref_params, True)
    assert jnp.allclose(out4, ref4, atol=1e-4, rtol=1e-4), "nl-last mismatch"

    print("KERNEL_OK")
</pallas_src>

<mosaic_0001>
module attributes {stable_mosaic.version = 11 : i64} {
  func.func @_fused_mlp_kernel(%arg0: i32, %arg1: memref<8x32xf32, #tpu.memory_space<vmem>>, %arg2: memref<32x128xf32, #tpu.memory_space<vmem>>, %arg3: memref<1x128xf32, #tpu.memory_space<vmem>>, %arg4: memref<128x128xf32, #tpu.memory_space<vmem>>, %arg5: memref<1x128xf32, #tpu.memory_space<vmem>>, %arg6: memref<128x128xf32, #tpu.memory_space<vmem>>, %arg7: memref<1x128xf32, #tpu.memory_space<vmem>>, %arg8: memref<8x128xf32, #tpu.memory_space<vmem>>) attributes {dimension_semantics = [#tpu.dimension_semantics<parallel>], iteration_bounds = array<i64: 1>, scalar_prefetch = 0 : i64, scratch_operands = 0 : i64, tpu.core_type = #tpu.core_type<tc>, window_params = [{transform_indices = @transform_0, window_bounds = array<i64: 8, 32>}, {pipeline_mode = #tpu.pipeline_mode<synchronous>, transform_indices = @transform_1, window_bounds = array<i64: 32, 128>}, {pipeline_mode = #tpu.pipeline_mode<synchronous>, transform_indices = @transform_2, window_bounds = array<i64: 1, 128>}, {pipeline_mode = #tpu.pipeline_mode<synchronous>, transform_indices = @transform_3, window_bounds = array<i64: 128, 128>}, {pipeline_mode = #tpu.pipeline_mode<synchronous>, transform_indices = @transform_4, window_bounds = array<i64: 1, 128>}, {pipeline_mode = #tpu.pipeline_mode<synchronous>, transform_indices = @transform_5, window_bounds = array<i64: 128, 128>}, {pipeline_mode = #tpu.pipeline_mode<synchronous>, transform_indices = @transform_6, window_bounds = array<i64: 1, 128>}, {transform_indices = @transform_7, window_bounds = array<i64: 8, 128>}]} {
    %c0 = arith.constant 0 : index
    %c0_0 = arith.constant 0 : index
    %0 = vector.load %arg1[%c0, %c0_0] : memref<8x32xf32, #tpu.memory_space<vmem>>, vector<8x32xf32>
    %c0_1 = arith.constant 0 : index
    %c0_2 = arith.constant 0 : index
    %1 = vector.load %arg2[%c0_1, %c0_2] : memref<32x128xf32, #tpu.memory_space<vmem>>, vector<32x128xf32>
    %c0_3 = arith.constant 0 : index
    %c0_4 = arith.constant 0 : index
    %2 = vector.load %arg3[%c0_3, %c0_4] : memref<1x128xf32, #tpu.memory_space<vmem>>, vector<1x128xf32>
    %cst = arith.constant dense<0.000000e+00> : vector<8x128xf32>
    %3 = tpu.matmul %0, %1, %cst {dimension_numbers = #tpu.dot_dimension_numbers<[1], [0], [0], [1], [0, 0, 1, 1], [], []>} : vector<8x32xf32>, vector<32x128xf32>, vector<8x128xf32> -> vector<8x128xf32>
    %4 = vector.broadcast %2 : vector<1x128xf32> to vector<8x128xf32>
    %5 = arith.addf %3, %4 : vector<8x128xf32>
    %cst_5 = arith.constant 0.000000e+00 : f32
    %6 = vector.broadcast %cst_5 : f32 to vector<8x128xf32>
    %7 = arith.maximumf %5, %6 : vector<8x128xf32>
    %c0_6 = arith.constant 0 : index
    %c0_7 = arith.constant 0 : index
    %8 = vector.load %arg4[%c0_6, %c0_7] : memref<128x128xf32, #tpu.memory_space<vmem>>, vector<128x128xf32>
    %c0_8 = arith.constant 0 : index
    %c0_9 = arith.constant 0 : index
    %9 = vector.load %arg5[%c0_8, %c0_9] : memref<1x128xf32, #tpu.memory_space<vmem>>, vector<1x128xf32>
    %cst_10 = arith.constant dense<0.000000e+00> : vector<8x128xf32>
    %10 = tpu.matmul %7, %8, %cst_10 {dimension_numbers = #tpu.dot_dimension_numbers<[1], [0], [0], [1], [0, 0, 1, 1], [], []>} : vector<8x128xf32>, vector<128x128xf32>, vector<8x128xf32> -> vector<8x128xf32>
    %11 = vector.broadcast %9 : vector<1x128xf32> to vector<8x128xf32>
    %12 = arith.addf %10, %11 : vector<8x128xf32>
    %cst_11 = arith.constant 0.000000e+00 : f32
    %13 = vector.broadcast %cst_11 : f32 to vector<8x128xf32>
    %14 = arith.maximumf %12, %13 : vector<8x128xf32>
    %c0_12 = arith.constant 0 : index
    %c0_13 = arith.constant 0 : index
    %15 = vector.load %arg6[%c0_12, %c0_13] : memref<128x128xf32, #tpu.memory_space<vmem>>, vector<128x128xf32>
    %c0_14 = arith.constant 0 : index
    %c0_15 = arith.constant 0 : index
    %16 = vector.load %arg7[%c0_14, %c0_15] : memref<1x128xf32, #tpu.memory_space<vmem>>, vector<1x128xf32>
    %cst_16 = arith.constant dense<0.000000e+00> : vector<8x128xf32>
    %17 = tpu.matmul %14, %15, %cst_16 {dimension_numbers = #tpu.dot_dimension_numbers<[1], [0], [0], [1], [0, 0, 1, 1], [], []>} : vector<8x128xf32>, vector<128x128xf32>, vector<8x128xf32> -> vector<8x128xf32>
    %18 = vector.broadcast %16 : vector<1x128xf32> to vector<8x128xf32>
    %19 = arith.addf %17, %18 : vector<8x128xf32>
    %c0_17 = arith.constant 0 : index
    %c0_18 = arith.constant 0 : index
    %20 = vector.load %arg8[%c0_17, %c0_18] : memref<8x128xf32, #tpu.memory_space<vmem>>, vector<8x128xf32>
    tpu.vector_store %arg8[%c0_17, %c0_18], %19 {strides = array<i32>} : memref<8x128xf32, #tpu.memory_space<vmem>>, vector<8x128xf32>,
    return
  }
  func.func @transform_0(%arg0: i32) -> (i32, i32) {
    %c0_i32 = arith.constant 0 : i32
    %c0_i32_0 = arith.constant 0 : i32
    return %arg0, %c0_i32 : i32, i32
  }
  func.func @transform_1(%arg0: i32) -> (i32, i32) {
    %c0_i32 = arith.constant 0 : i32
    %c0_i32_0 = arith.constant 0 : i32
    %c0_i32_1 = arith.constant 0 : i32
    return %c0_i32, %c0_i32_0 : i32, i32
  }
  func.func @transform_2(%arg0: i32) -> (i32, i32) {
    %c0_i32 = arith.constant 0 : i32
    %c0_i32_0 = arith.constant 0 : i32
    %c0_i32_1 = arith.constant 0 : i32
    return %c0_i32, %c0_i32_0 : i32, i32
  }
  func.func @transform_3(%arg0: i32) -> (i32, i32) {
    %c0_i32 = arith.constant 0 : i32
    %c0_i32_0 = arith.constant 0 : i32
    %c0_i32_1 = arith.constant 0 : i32
    return %c0_i32, %c0_i32_0 : i32, i32
  }
  func.func @transform_4(%arg0: i32) -> (i32, i32) {
    %c0_i32 = arith.constant 0 : i32
    %c0_i32_0 = arith.constant 0 : i32
    %c0_i32_1 = arith.constant 0 : i32
    return %c0_i32, %c0_i32_0 : i32, i32
  }
  func.func @transform_5(%arg0: i32) -> (i32, i32) {
    %c0_i32 = arith.constant 0 : i32
    %c0_i32_0 = arith.constant 0 : i32
    %c0_i32_1 = arith.constant 0 : i32
    return %c0_i32, %c0_i32_0 : i32, i32
  }
  func.func @transform_6(%arg0: i32) -> (i32, i32) {
    %c0_i32 = arith.constant 0 : i32
    %c0_i32_0 = arith.constant 0 : i32
    %c0_i32_1 = arith.constant 0 : i32
    return %c0_i32, %c0_i32_0 : i32, i32
  }
  func.func @transform_7(%arg0: i32) -> (i32, i32) {
    %c0_i32 = arith.constant 0 : i32
    %c0_i32_0 = arith.constant 0 : i32
    return %arg0, %c0_i32 : i32, i32
  }
}

module attributes {stable_mosaic.version = 11 : i64} {
  func.func @_fused_mlp_kernel(%arg0: i32, %arg1: memref<8x32xf32, #tpu.memory_space<vmem>>, %arg2: memref<32x128xf32, #tpu.memory_space<vmem>>, %arg3: memref<1x128xf32, #tpu.memory_space<vmem>>, %arg4: memref<128x128xf32, #tpu.memory_space<vmem>>, %arg5: memref<1x128xf32, #tpu.memory_space<vmem>>, %arg6: memref<128x128xf32, #tpu.memory_space<vmem>>, %arg7: memref<1x128xf32, #tpu.memory_space<vmem>>, %arg8: memref<8x128xf32, #tpu.memory_space<vmem>>) attributes {dimension_semantics = [#tpu.dimension_semantics<parallel>], iteration_bounds = array<i64: 1>, scalar_prefetch = 0 : i64, scratch_operands = 0 : i64, tpu.core_type = #tpu.core_type<tc>, window_params = [{transform_indices = @transform_0, window_bounds = array<i64: 8, 32>}, {pipeline_mode = #tpu.pipeline_mode<synchronous>, transform_indices = @transform_1, window_bounds = array<i64: 32, 128>}, {pipeline_mode = #tpu.pipeline_mode<synchronous>, transform_indices = @transform_2, window_bounds = array<i64: 1, 128>}, {pipeline_mode = #tpu.pipeline_mode<synchronous>, transform_indices = @transform_3, window_bounds = array<i64: 128, 128>}, {pipeline_mode = #tpu.pipeline_mode<synchronous>, transform_indices = @transform_4, window_bounds = array<i64: 1, 128>}, {pipeline_mode = #tpu.pipeline_mode<synchronous>, transform_indices = @transform_5, window_bounds = array<i64: 128, 128>}, {pipeline_mode = #tpu.pipeline_mode<synchronous>, transform_indices = @transform_6, window_bounds = array<i64: 1, 128>}, {transform_indices = @transform_7, window_bounds = array<i64: 8, 128>}]} {
    %c0 = arith.constant 0 : index
    %c0_0 = arith.constant 0 : index
    %0 = vector.load %arg1[%c0, %c0_0] : memref<8x32xf32, #tpu.memory_space<vmem>>, vector<8x32xf32>
    %c0_1 = arith.constant 0 : index
    %c0_2 = arith.constant 0 : index
    %1 = vector.load %arg2[%c0_1, %c0_2] : memref<32x128xf32, #tpu.memory_space<vmem>>, vector<32x128xf32>
    %c0_3 = arith.constant 0 : index
    %c0_4 = arith.constant 0 : index
    %2 = vector.load %arg3[%c0_3, %c0_4] : memref<1x128xf32, #tpu.memory_space<vmem>>, vector<1x128xf32>
    %cst = arith.constant dense<0.000000e+00> : vector<8x128xf32>
    %3 = tpu.matmul %0, %1, %cst {dimension_numbers = #tpu.dot_dimension_numbers<[1], [0], [0], [1], [0, 0, 1, 1], [], []>} : vector<8x32xf32>, vector<32x128xf32>, vector<8x128xf32> -> vector<8x128xf32>
    %4 = vector.broadcast %2 : vector<1x128xf32> to vector<8x128xf32>
    %5 = arith.addf %3, %4 : vector<8x128xf32>
    %cst_5 = arith.constant 0.000000e+00 : f32
    %6 = vector.broadcast %cst_5 : f32 to vector<8x128xf32>
    %7 = arith.maximumf %5, %6 : vector<8x128xf32>
    %c0_6 = arith.constant 0 : index
    %c0_7 = arith.constant 0 : index
    %8 = vector.load %arg4[%c0_6, %c0_7] : memref<128x128xf32, #tpu.memory_space<vmem>>, vector<128x128xf32>
    %c0_8 = arith.constant 0 : index
    %c0_9 = arith.constant 0 : index
    %9 = vector.load %arg5[%c0_8, %c0_9] : memref<1x128xf32, #tpu.memory_space<vmem>>, vector<1x128xf32>
    %cst_10 = arith.constant dense<0.000000e+00> : vector<8x128xf32>
    %10 = tpu.matmul %7, %8, %cst_10 {dimension_numbers = #tpu.dot_dimension_numbers<[1], [0], [0], [1], [0, 0, 1, 1], [], []>} : vector<8x128xf32>, vector<128x128xf32>, vector<8x128xf32> -> vector<8x128xf32>
    %11 = vector.broadcast %9 : vector<1x128xf32> to vector<8x128xf32>
    %12 = arith.addf %10, %11 : vector<8x128xf32>
    %cst_11 = arith.constant 0.000000e+00 : f32
    %13 = vector.broadcast %cst_11 : f32 to vector<8x128xf32>
    %14 = arith.maximumf %12, %13 : vector<8x128xf32>
    %c0_12 = arith.constant 0 : index
    %c0_13 = arith.constant 0 : index
    %15 = vector.load %arg6[%c0_12, %c0_13] : memref<128x128xf32, #tpu.memory_space<vmem>>, vector<128x128xf32>
    %c0_14 = arith.constant 0 : index
    %c0_15 = arith.constant 0 : index
    %16 = vector.load %arg7[%c0_14, %c0_15] : memref<1x128xf32, #tpu.memory_space<vmem>>, vector<1x128xf32>
    %cst_16 = arith.constant dense<0.000000e+00> : vector<8x128xf32>
    %17 = tpu.matmul %14, %15, %cst_16 {dimension_numbers = #tpu.dot_dimension_numbers<[1], [0], [0], [1], [0, 0, 1, 1], [], []>} : vector<8x128xf32>, vector<128x128xf32>, vector<8x128xf32> -> vector<8x128xf32>
    %18 = vector.broadcast %16 : vector<1x128xf32> to vector<8x128xf32>
    %19 = arith.addf %17, %18 : vector<8x128xf32>
    %c0_17 = arith.constant 0 : index
    %c0_18 = arith.constant 0 : index
    %20 = vector.load %arg8[%c0_17, %c0_18] : memref<8x128xf32, #tpu.memory_space<vmem>>, vector<8x128xf32>
    tpu.vector_store %arg8[%c0_17, %c0_18], %19 {strides = array<i32>} : memref<8x128xf32, #tpu.memory_space<vmem>>, vector<8x128xf32>,
    return
  }
  func.func @transform_0(%arg0: i32) -> (i32, i32) {
    %c0_i32 = arith.constant 0 : i32
    %c0_i32_0 = arith.constant 0 : i32
    return %arg0, %c0_i32 : i32, i32
  }
  func.func @transform_1(%arg0: i32) -> (i32, i32) {
    %c0_i32 = arith.constant 0 : i32
    %c0_i32_0 = arith.constant 0 : i32
    %c0_i32_1 = arith.constant 0 : i32
    return %c0_i32, %c0_i32_0 : i32, i32
  }
  func.func @transform_2(%arg0: i32) -> (i32, i32) {
    %c0_i32 = arith.constant 0 : i32
    %c0_i32_0 = arith.constant 0 : i32
    %c0_i32_1 = arith.constant 0 : i32
    return %c0_i32, %c0_i32_0 : i32, i32
  }
  func.func @transform_3(%arg0: i32) -> (i32, i32) {
    %c0_i32 = arith.constant 0 : i32
    %c0_i32_0 = arith.constant 0 : i32
    %c0_i32_1 = arith.constant 0 : i32
    return %c0_i32, %c0_i32_0 : i32, i32
  }
  func.func @transform_4(%arg0: i32) -> (i32, i32) {
    %c0_i32 = arith.constant 0 : i32
    %c0_i32_0 = arith.constant 0 : i32
    %c0_i32_1 = arith.constant 0 : i32
    return %c0_i32, %c0_i32_0 : i32, i32
  }
  func.func @transform_5(%arg0: i32) -> (i32, i32) {
    %c0_i32 = arith.constant 0 : i32
    %c0_i32_0 = arith.constant 0 : i32
    %c0_i32_1 = arith.constant 0 : i32
    return %c0_i32, %c0_i32_0 : i32, i32
  }
  func.func @transform_6(%arg0: i32) -> (i32, i32) {
    %c0_i32 = arith.constant 0 : i32
    %c0_i32_0 = arith.constant 0 : i32
    %c0_i32_1 = arith.constant 0 : i32
    return %c0_i32, %c0_i32_0 : i32, i32
  }
  func.func @transform_7(%arg0: i32) -> (i32, i32) {
    %c0_i32 = arith.constant 0 : i32
    %c0_i32_0 = arith.constant 0 : i32
    return %arg0, %c0_i32 : i32, i32
  }
}

</mosaic_0001>

<llo_original>
// kernel: tpu_custom_call.1
$region0: #{tpu_custom_call.1}
  #allocation0 [shape = 'u32[]', space=smem, size = 0x4, offset = 0x4, fixed_abs, tag = 'smem constant byte address 0x4 - core index']
  #allocation1 [shape = 'u32[144,128]{1,0:T(1,128)}', space=vmem, size = 0x12000, scoped, tag = 'internal scratch']
  %s0 = inlined_call_operand.hbm [shape: f32[8,32], index: 0, kind: input, shape index: {}]
  %s1 = inlined_call_operand.hbm [shape: f32[32,128], index: 1, kind: input, shape index: {}]
  %s2 = inlined_call_operand.vmem [shape: f32[1,128], index: 2, kind: input, shape index: {}]
  %s3 = inlined_call_operand.hbm [shape: f32[128,128], index: 3, kind: input, shape index: {}]
  %s4 = inlined_call_operand.vmem [shape: f32[1,128], index: 4, kind: input, shape index: {}]
  %s5 = inlined_call_operand.hbm [shape: f32[128,128], index: 5, kind: input, shape index: {}]
  %s6 = inlined_call_operand.vmem [shape: f32[1,128], index: 6, kind: input, shape index: {}]
  %s7 = inlined_call_operand.hbm [shape: f32[8,128], index: 7, kind: output, shape index: {}]
  %s8 = sld [smem:[#allocation0]]
  $region54: #{tpu_custom_call.1} parent=0
    _
  %s10 = ssub.s32 1, %s8
  %s11 = scalar_select 0, %s10, %s8
  $region1: #{tpu_custom_call.1} parent=0
    #allocation2 [shape = 'u8[4096]{0}', space=vmem, size = 0x1000, scoped, tag = 'input window, operand 0, single buffered']
    #allocation3 [shape = 's32[1]{0}', space=sflag, size = 0x4, scoped, tag = 'scoped memory for tpu_custom_call.1']
    #allocation4 [shape = 's32[1]{0}', space=sflag, size = 0x4, scoped, tag = 'scoped memory for tpu_custom_call.1']
    #allocation5 [shape = 'u8[16384]{0}', space=vmem, size = 0x4000, scoped, tag = 'input window, operand 1, single buffered']
    #allocation6 [shape = 's32[1]{0}', space=sflag, size = 0x4, scoped, tag = 'scoped memory for tpu_custom_call.1']
    #allocation7 [shape = 'u8[65536]{0}', space=vmem, size = 0x10000, scoped, tag = 'input window, operand 3, single buffered']
    #allocation8 [shape = 'u8[65536]{0}', space=vmem, size = 0x10000, scoped, tag = 'input window, operand 5, single buffered']
    #allocation9 [shape = 's32[1]{0}', space=sflag, size = 0x4, scoped, tag = 'scoped memory for tpu_custom_call.1']
    #allocation10 [shape = 'u8[4096]{0}', space=vmem, size = 0x1000, scoped, tag = 'output window, operand 0, single buffered']
    %12 = vsyncpa [#allocation3], 0
    %13 = vsyncpa [#allocation6], 0
    %14 = vsyncpa [#allocation9], 0
    %15 = vsyncpa [#allocation4], 0
    // Predicated region
    $region2: #{tpu_custom_call.1} parent=1 // pred_check
      _
    $region3: #{tpu_custom_call.1} parent=1 // pred_check_branch
      %17 = sbr.rel (0) target = $region5
    $region4: #{tpu_custom_call.1} parent=1 // pred_region
      %s19 = ssub.s32 128, 128
      %20 = vsyncadd [#allocation3], %s19
      %s22 = sshll.u32 [#allocation2], 4
      %s23 = int_to_ptr.vmem [resolvable:$true] %s22
      %25 = dma.hbm_to_vmem [thread:$0]  %s0, 128, %s23, [#allocation3]
    $region5: #{tpu_custom_call.1} parent=1 // pred_fallthru
      _
    // Predicated region
    $region6: #{tpu_custom_call.1} parent=1 // pred_check
      _
    $region7: #{tpu_custom_call.1} parent=1 // pred_check_branch
      %27 = sbr.rel (0) target = $region9
    $region8: #{tpu_custom_call.1} parent=1 // pred_region
      %s29 = ssub.s32 512, 512
      %30 = vsyncadd [#allocation6], %s29
      %s31 = sshll.u32 [#allocation5], 4
      %s32 = int_to_ptr.vmem [resolvable:$true] %s31
      %37 = dma.hbm_to_vmem [thread:$0]  %s1, 512, %s32, [#allocation6], 128, 128, 8
    $region9: #{tpu_custom_call.1} parent=1 // pred_fallthru
      _
    // Predicated region
    $region10: #{tpu_custom_call.1} parent=1 // pred_check
      _
    $region11: #{tpu_custom_call.1} parent=1 // pred_check_branch
      %39 = sbr.rel (0) target = $region13
    $region12: #{tpu_custom_call.1} parent=1 // pred_region
      _
    $region13: #{tpu_custom_call.1} parent=1 // pred_fallthru
      _
    // Predicated region
    $region14: #{tpu_custom_call.1} parent=1 // pred_check
      _
    $region15: #{tpu_custom_call.1} parent=1 // pred_check_branch
      %41 = sbr.rel (0) target = $region17
    $region16: #{tpu_custom_call.1} parent=1 // pred_region
      %s43 = ssub.s32 2048, 2048
      %44 = vsyncadd [#allocation6], %s43
      %s45 = sshll.u32 [#allocation7], 4
      %s46 = int_to_ptr.vmem [resolvable:$true] %s45
      %51 = dma.hbm_to_vmem [thread:$0]  %s3, 2048, %s46, [#allocation6], 128, 128, 8
    $region17: #{tpu_custom_call.1} parent=1 // pred_fallthru
      _
    // Predicated region
    $region18: #{tpu_custom_call.1} parent=1 // pred_check
      _
    $region19: #{tpu_custom_call.1} parent=1 // pred_check_branch
      %53 = sbr.rel (0) target = $region21
    $region20: #{tpu_custom_call.1} parent=1 // pred_region
      _
    $region21: #{tpu_custom_call.1} parent=1 // pred_fallthru
      _
    // Predicated region
    $region22: #{tpu_custom_call.1} parent=1 // pred_check
      _
    $region23: #{tpu_custom_call.1} parent=1 // pred_check_branch
      %55 = sbr.rel (0) target = $region25
    $region24: #{tpu_custom_call.1} parent=1 // pred_region
      %s57 = ssub.s32 2048, 2048
      %58 = vsyncadd [#allocation9], %s57
      %s59 = sshll.u32 [#allocation8], 4
      %s60 = int_to_ptr.vmem [resolvable:$true] %s59
      %65 = dma.hbm_to_vmem [thread:$0]  %s5, 2048, %s60, [#allocation9], 128, 128, 8
    $region25: #{tpu_custom_call.1} parent=1 // pred_fallthru
      _
    // Predicated region
    $region26: #{tpu_custom_call.1} parent=1 // pred_check
      _
    $region27: #{tpu_custom_call.1} parent=1 // pred_check_branch
      %67 = sbr.rel (0) target = $region29
    $region28: #{tpu_custom_call.1} parent=1 // pred_region
      _
    $region29: #{tpu_custom_call.1} parent=1 // pred_fallthru
      _
    // Predicated region
    $region30: #{tpu_custom_call.1} parent=1 // pred_check
      _
    $region31: #{tpu_custom_call.1} parent=1 // pred_check_branch
      %69 = sbr.rel (0) target = $region33
    $region32: #{tpu_custom_call.1} parent=1 // pred_region
      %70 = dma.done [#allocation3], 128
    $region33: #{tpu_custom_call.1} parent=1 // pred_fallthru
      _
    // Predicated region
    $region34: #{tpu_custom_call.1} parent=1 // pred_check
      _
    $region35: #{tpu_custom_call.1} parent=1 // pred_check_branch
      %72 = sbr.rel (0) target = $region37
    $region36: #{tpu_custom_call.1} parent=1 // pred_region
      %73 = dma.done [#allocation6], 512
    $region37: #{tpu_custom_call.1} parent=1 // pred_fallthru
      _
    // Predicated region
    $region38: #{tpu_custom_call.1} parent=1 // pred_check
      _
    $region39: #{tpu_custom_call.1} parent=1 // pred_check_branch
      %75 = sbr.rel (0) target = $region41
    $region40: #{tpu_custom_call.1} parent=1 // pred_region
      %76 = dma.done [#allocation6], 2048
    $region41: #{tpu_custom_call.1} parent=1 // pred_fallthru
      _
    // Predicated region
    $region42: #{tpu_custom_call.1} parent=1 // pred_check
      _
    $region43: #{tpu_custom_call.1} parent=1 // pred_check_branch
      %78 = sbr.rel (0) target = $region45
    $region44: #{tpu_custom_call.1} parent=1 // pred_region
      %79 = dma.done [#allocation9], 2048
    $region45: #{tpu_custom_call.1} parent=1 // pred_fallthru
      _
    %v80 = vld [vmem:[#allocation2] sm:$0xff]
    %v81 = vld [vmem:[#allocation5] sm:$0xff]
    %v82 = vld [vmem:[#allocation5 + $0x8] sm:$0xff]
    %v83 = vld [vmem:[#allocation5 + $0x10] sm:$0xff]
    %v84 = vld [vmem:[#allocation5 + $0x18] sm:$0xff]
    %v85 = vld [vmem:[%s2] sm:$0x1]
    %v87 = vlaneseq
    %v88 = vshrl.u32 %v87, 7
    %v89 = vsub.s32 0, %v88
    %v90 = vrot.slane %v85, %v89
    %vm92 = vcmask 261120
    %v94 = vsel %vm92, %v80, 0
    %96 = vmatprep.subr.mxu0 0.0
    %97 = vmatpush1.msra.mxu0 0.0
    %98 = vmatprep.subr.mxu0 0.0
    %99 = vmatpush1.msra.mxu0 0.0
    %100 = vmatprep.subr.mxu0 0.0
    %101 = vmatpush1.msra.mxu0 0.0
    %102 = vmatprep.subr.mxu0 0.0
    %103 = vmatpush1.msra.mxu0 0.0
    %104 = vmatprep.subr.mxu0 0.0
    %105 = vmatpush1.msra.mxu0 0.0
    %106 = vmatprep.subr.mxu0 0.0
    %107 = vmatpush1.msra.mxu0 0.0
    %108 = vmatprep.subr.mxu0 0.0
    %109 = vmatpush1.msra.mxu0 0.0
    %110 = vmatprep.subr.mxu0 0.0
    %111 = vmatpush1.msra.mxu0 0.0
    %112 = vmatprep.subr.mxu0 0.0
    %113 = vmatpush1.msra.mxu0 0.0
    %114 = vmatprep.subr.mxu0 0.0
    %115 = vmatpush1.msra.mxu0 0.0
    %116 = vmatprep.subr.mxu0 0.0
    %117 = vmatpush1.msra.mxu0 0.0
    %118 = vmatprep.subr.mxu0 0.0
    %119 = vmatpush1.msra.mxu0 0.0
    %120 = vmatprep.subr.mxu0 0.0
    %121 = vmatpush1.msra.mxu0 %v84
    %122 = vmatprep.subr.mxu0 0.0
    %123 = vmatpush1.msra.mxu0 %v83
    %124 = vmatprep.subr.mxu0 0.0
    %125 = vmatpush1.msra.mxu0 %v82
    %126 = vmatprep.subr.mxu0 0.0
    %127 = vmatpush1.msra.mxu0 %v81
    %128 = vmatprep.subr.mxu0 0.0
    %129 = vmatpush2.msra.mxu0 0.0
    %130 = vmatprep.subr.mxu0 0.0
    %131 = vmatpush2.msra.mxu0 0.0
    %132 = vmatprep.subr.mxu0 0.0
    %133 = vmatpush2.msra.mxu0 0.0
    %134 = vmatprep.subr.mxu0 0.0
    %135 = vmatpush2.msra.mxu0 0.0
    %136 = vmatprep.subr.mxu0 0.0
    %137 = vmatpush2.msra.mxu0 0.0
    %138 = vmatprep.subr.mxu0 0.0
    %139 = vmatpush2.msra.mxu0 0.0
    %140 = vmatprep.subr.mxu0 0.0
    %141 = vmatpush2.msra.mxu0 0.0
    %142 = vmatprep.subr.mxu0 0.0
    %143 = vmatpush2.msra.mxu0 0.0
    %144 = vmatprep.subr.mxu0 0.0
    %145 = vmatpush2.msra.mxu0 0.0
    %146 = vmatprep.subr.mxu0 0.0
    %147 = vmatpush2.msra.mxu0 0.0
    %148 = vmatprep.subr.mxu0 0.0
    %149 = vmatpush2.msra.mxu0 0.0
    %150 = vmatprep.subr.mxu0 0.0
    %151 = vmatpush2.msra.mxu0 0.0
    %152 = vmatprep.subr.mxu0 0.0
    %153 = vmatpush2.msra.mxu0 0.0
    %154 = vmatprep.subr.mxu0 0.0
    %155 = vmatpush2.msra.mxu0 0.0
    %156 = vmatprep.subr.mxu0 0.0
    %157 = vmatpush2.msra.mxu0 0.0
    %158 = vmatprep.subr.mxu0 0.0
    %159 = vmatpush2.msra.mxu0 0.0
    %160 = vmatprep.mubr.f32.mxu0 0.0
    %161 = vmatmul.mubr.f32.gmra.mxu0 %v94
    %v162 = vpop.f32.mrf.mxu0
    %v163 = vadd.f32 %v90, %v162
    %v164 = vpop.f32.mrf.mxu0
    %165 = vdwg.mxu0
    %v166 = vmax.f32 %v163, 0.0
    %v167 = vld [vmem:[#allocation7] sm:$0xff]
    %v168 = vld [vmem:[#allocation7 + $0x8] sm:$0xff]
    %v169 = vld [vmem:[#allocation7 + $0x10] sm:$0xff]
    %v170 = vld [vmem:[#allocation7 + $0x18] sm:$0xff]
    %v171 = vld [vmem:[#allocation7 + $0x20] sm:$0xff]
    %v172 = vld [vmem:[#allocation7 + $0x28] sm:$0xff]
    %v173 = vld [vmem:[#allocation7 + $0x30] sm:$0xff]
    %v174 = vld [vmem:[#allocation7 + $0x38] sm:$0xff]
    %v175 = vld [vmem:[#allocation7 + $0x40] sm:$0xff]
    %v176 = vld [vmem:[#allocation7 + $0x48] sm:$0xff]
    %v177 = vld [vmem:[#allocation7 + $0x50] sm:$0xff]
    %v178 = vld [vmem:[#allocation7 + $0x58] sm:$0xff]
    %v179 = vld [vmem:[#allocation7 + $0x60] sm:$0xff]
    %v180 = vld [vmem:[#allocation7 + $0x68] sm:$0xff]
    %v181 = vld [vmem:[#allocation7 + $0x70] sm:$0xff]
    %v182 = vld [vmem:[#allocation7 + $0x78] sm:$0xff]
    %v183 = vld [vmem:[%s4] sm:$0x1]
    %v185 = vlaneseq
    %v186 = vshrl.u32 %v185, 7
    %v187 = vsub.s32 0, %v186
    %v188 = vrot.slane %v183, %v187
    %190 = vmatprep.subr.mxu0 0.0
    %191 = vmatpush1.msra.mxu0 %v182
    %192 = vmatprep.subr.mxu0 0.0
    %193 = vmatpush1.msra.mxu0 %v181
    %194 = vmatprep.subr.mxu0 0.0
    %195 = vmatpush1.msra.mxu0 %v180
    %196 = vmatprep.subr.mxu0 0.0
    %197 = vmatpush1.msra.mxu0 %v179
    %198 = vmatprep.subr.mxu0 0.0
    %199 = vmatpush1.msra.mxu0 %v178
    %200 = vmatprep.subr.mxu0 0.0
    %201 = vmatpush1.msra.mxu0 %v177
    %202 = vmatprep.subr.mxu0 0.0
    %203 = vmatpush1.msra.mxu0 %v176
    %204 = vmatprep.subr.mxu0 0.0
    %205 = vmatpush1.msra.mxu0 %v175
    %206 = vmatprep.subr.mxu0 0.0
    %207 = vmatpush1.msra.mxu0 %v174
    %208 = vmatprep.subr.mxu0 0.0
    %209 = vmatpush1.msra.mxu0 %v173
    %210 = vmatprep.subr.mxu0 0.0
    %211 = vmatpush1.msra.mxu0 %v172
    %212 = vmatprep.subr.mxu0 0.0
    %213 = vmatpush1.msra.mxu0 %v171
    %214 = vmatprep.subr.mxu0 0.0
    %215 = vmatpush1.msra.mxu0 %v170
    %216 = vmatprep.subr.mxu0 0.0
    %217 = vmatpush1.msra.mxu0 %v169
    %218 = vmatprep.subr.mxu0 0.0
    %219 = vmatpush1.msra.mxu0 %v168
    %220 = vmatprep.subr.mxu0 0.0
    %221 = vmatpush1.msra.mxu0 %v167
    %222 = vmatprep.subr.mxu0 0.0
    %223 = vmatpush2.msra.mxu0 0.0
    %224 = vmatprep.subr.mxu0 0.0
    %225 = vmatpush2.msra.mxu0 0.0
    %226 = vmatprep.subr.mxu0 0.0
    %227 = vmatpush2.msra.mxu0 0.0
    %228 = vmatprep.subr.mxu0 0.0
    %229 = vmatpush2.msra.mxu0 0.0
    %230 = vmatprep.subr.mxu0 0.0
    %231 = vmatpush2.msra.mxu0 0.0
    %232 = vmatprep.subr.mxu0 0.0
    %233 = vmatpush2.msra.mxu0 0.0
    %234 = vmatprep.subr.mxu0 0.0
    %235 = vmatpush2.msra.mxu0 0.0
    %236 = vmatprep.subr.mxu0 0.0
    %237 = vmatpush2.msra.mxu0 0.0
    %238 = vmatprep.subr.mxu0 0.0
    %239 = vmatpush2.msra.mxu0 0.0
    %240 = vmatprep.subr.mxu0 0.0
    %241 = vmatpush2.msra.mxu0 0.0
    %242 = vmatprep.subr.mxu0 0.0
    %243 = vmatpush2.msra.mxu0 0.0
    %244 = vmatprep.subr.mxu0 0.0
    %245 = vmatpush2.msra.mxu0 0.0
    %246 = vmatprep.subr.mxu0 0.0
    %247 = vmatpush2.msra.mxu0 0.0
    %248 = vmatprep.subr.mxu0 0.0
    %249 = vmatpush2.msra.mxu0 0.0
    %250 = vmatprep.subr.mxu0 0.0
    %251 = vmatpush2.msra.mxu0 0.0
    %252 = vmatprep.subr.mxu0 0.0
    %253 = vmatpush2.msra.mxu0 0.0
    %254 = vmatprep.mubr.f32.mxu0 0.0
    %255 = vmatmul.mubr.f32.gmra.mxu0 %v166
    %v256 = vpop.f32.mrf.mxu0
    %v257 = vadd.f32 %v188, %v256
    %v258 = vpop.f32.mrf.mxu0
    %259 = vdwg.mxu0
    %v260 = vmax.f32 %v257, 0.0
    %v261 = vld [vmem:[#allocation8] sm:$0xff]
    %v262 = vld [vmem:[#allocation8 + $0x8] sm:$0xff]
    %v263 = vld [vmem:[#allocation8 + $0x10] sm:$0xff]
    %v264 = vld [vmem:[#allocation8 + $0x18] sm:$0xff]
    %v265 = vld [vmem:[#allocation8 + $0x20] sm:$0xff]
    %v266 = vld [vmem:[#allocation8 + $0x28] sm:$0xff]
    %v267 = vld [vmem:[#allocation8 + $0x30] sm:$0xff]
    %v268 = vld [vmem:[#allocation8 + $0x38] sm:$0xff]
    %v269 = vld [vmem:[#allocation8 + $0x40] sm:$0xff]
    %v270 = vld [vmem:[#allocation8 + $0x48] sm:$0xff]
    %v271 = vld [vmem:[#allocation8 + $0x50] sm:$0xff]
    %v272 = vld [vmem:[#allocation8 + $0x58] sm:$0xff]
    %v273 = vld [vmem:[#allocation8 + $0x60] sm:$0xff]
    %v274 = vld [vmem:[#allocation8 + $0x68] sm:$0xff]
    %v275 = vld [vmem:[#allocation8 + $0x70] sm:$0xff]
    %v276 = vld [vmem:[#allocation8 + $0x78] sm:$0xff]
    %v277 = vld [vmem:[%s6] sm:$0x1]
    %v279 = vlaneseq
    %v280 = vshrl.u32 %v279, 7
    %v281 = vsub.s32 0, %v280
    %v282 = vrot.slane %v277, %v281
    %284 = vmatprep.subr.mxu0 0.0
    %285 = vmatpush1.msra.mxu0 %v276
    %286 = vmatprep.subr.mxu0 0.0
    %287 = vmatpush1.msra.mxu0 %v275
    %288 = vmatprep.subr.mxu0 0.0
    %289 = vmatpush1.msra.mxu0 %v274
    %290 = vmatprep.subr.mxu0 0.0
    %291 = vmatpush1.msra.mxu0 %v273
    %292 = vmatprep.subr.mxu0 0.0
    %293 = vmatpush1.msra.mxu0 %v272
    %294 = vmatprep.subr.mxu0 0.0
    %295 = vmatpush1.msra.mxu0 %v271
    %296 = vmatprep.subr.mxu0 0.0
    %297 = vmatpush1.msra.mxu0 %v270
    %298 = vmatprep.subr.mxu0 0.0
    %299 = vmatpush1.msra.mxu0 %v269
    %300 = vmatprep.subr.mxu0 0.0
    %301 = vmatpush1.msra.mxu0 %v268
    %302 = vmatprep.subr.mxu0 0.0
    %303 = vmatpush1.msra.mxu0 %v267
    %304 = vmatprep.subr.mxu0 0.0
    %305 = vmatpush1.msra.mxu0 %v266
    %306 = vmatprep.subr.mxu0 0.0
    %307 = vmatpush1.msra.mxu0 %v265
    %308 = vmatprep.subr.mxu0 0.0
    %309 = vmatpush1.msra.mxu0 %v264
    %310 = vmatprep.subr.mxu0 0.0
    %311 = vmatpush1.msra.mxu0 %v263
    %312 = vmatprep.subr.mxu0 0.0
    %313 = vmatpush1.msra.mxu0 %v262
    %314 = vmatprep.subr.mxu0 0.0
    %315 = vmatpush1.msra.mxu0 %v261
    %316 = vmatprep.subr.mxu0 0.0
    %317 = vmatpush2.msra.mxu0 0.0
    %318 = vmatprep.subr.mxu0 0.0
    %319 = vmatpush2.msra.mxu0 0.0
    %320 = vmatprep.subr.mxu0 0.0
    %321 = vmatpush2.msra.mxu0 0.0
    %322 = vmatprep.subr.mxu0 0.0
    %323 = vmatpush2.msra.mxu0 0.0
    %324 = vmatprep.subr.mxu0 0.0
    %325 = vmatpush2.msra.mxu0 0.0
    %326 = vmatprep.subr.mxu0 0.0
    %327 = vmatpush2.msra.mxu0 0.0
    %328 = vmatprep.subr.mxu0 0.0
    %329 = vmatpush2.msra.mxu0 0.0
    %330 = vmatprep.subr.mxu0 0.0
    %331 = vmatpush2.msra.mxu0 0.0
    %332 = vmatprep.subr.mxu0 0.0
    %333 = vmatpush2.msra.mxu0 0.0
    %334 = vmatprep.subr.mxu0 0.0
    %335 = vmatpush2.msra.mxu0 0.0
    %336 = vmatprep.subr.mxu0 0.0
    %337 = vmatpush2.msra.mxu0 0.0
    %338 = vmatprep.subr.mxu0 0.0
    %339 = vmatpush2.msra.mxu0 0.0
    %340 = vmatprep.subr.mxu0 0.0
    %341 = vmatpush2.msra.mxu0 0.0
    %342 = vmatprep.subr.mxu0 0.0
    %343 = vmatpush2.msra.mxu0 0.0
    %344 = vmatprep.subr.mxu0 0.0
    %345 = vmatpush2.msra.mxu0 0.0
    %346 = vmatprep.subr.mxu0 0.0
    %347 = vmatpush2.msra.mxu0 0.0
    %348 = vmatprep.mubr.f32.mxu0 0.0
    %349 = vmatmul.mubr.f32.gmra.mxu0 %v260
    %v350 = vpop.f32.mrf.mxu0
    %v351 = vadd.f32 %v282, %v350
    %v352 = vpop.f32.mrf.mxu0
    %353 = vdwg.mxu0
    %354 = vst [vmem:[#allocation10] sm:$0xff] %v351
    // Predicated region
    $region46: #{tpu_custom_call.1} parent=1 // pred_check
      _
    $region47: #{tpu_custom_call.1} parent=1 // pred_check_branch
      %356 = sbr.rel (0) target = $region49
    $region48: #{tpu_custom_call.1} parent=1 // pred_region
      %s358 = ssub.s32 128, 128
      %359 = vsyncadd [#allocation4], %s358
      %s361 = sshll.u32 [#allocation10], 4
      %s362 = int_to_ptr.vmem [resolvable:$true] %s361
      %364 = dma.vmem_to_hbm [thread:$0]  %s362, 128, %s7, [#allocation4]
    $region49: #{tpu_custom_call.1} parent=1 // pred_fallthru
      _
    // Predicated region
    $region50: #{tpu_custom_call.1} parent=1 // pred_check
      _
    $region51: #{tpu_custom_call.1} parent=1 // pred_check_branch
      %366 = sbr.rel (0) target = $region53
    $region52: #{tpu_custom_call.1} parent=1 // pred_region
      %367 = dma.done [#allocation4], 128
    $region53: #{tpu_custom_call.1} parent=1 // pred_fallthru
      _
    %368 = vsyncpa [#allocation3], 1
    %369 = vsyncpa [#allocation6], 1
    %370 = vsyncpa [#allocation9], 1
    %371 = vsyncpa [#allocation4], 1

// kernel: tpu_custom_call.1
$region0: #{tpu_custom_call.1}
  #allocation0 [shape = 'u32[]', space=smem, size = 0x4, offset = 0x4, fixed_abs, tag = 'smem constant byte address 0x4 - core index']
  #allocation1 [shape = 'u32[144,128]{1,0:T(1,128)}', space=vmem, size = 0x12000, scoped, tag = 'internal scratch']
  %s0 = inlined_call_operand.hbm [shape: f32[8,32], index: 0, kind: input, shape index: {}]
  %s1 = inlined_call_operand.hbm [shape: f32[32,128], index: 1, kind: input, shape index: {}]
  %s2 = inlined_call_operand.vmem [shape: f32[1,128], index: 2, kind: input, shape index: {}]
  %s3 = inlined_call_operand.hbm [shape: f32[128,128], index: 3, kind: input, shape index: {}]
  %s4 = inlined_call_operand.vmem [shape: f32[1,128], index: 4, kind: input, shape index: {}]
  %s5 = inlined_call_operand.hbm [shape: f32[128,128], index: 5, kind: input, shape index: {}]
  %s6 = inlined_call_operand.vmem [shape: f32[1,128], index: 6, kind: input, shape index: {}]
  %s7 = inlined_call_operand.hbm [shape: f32[8,128], index: 7, kind: output, shape index: {}]
  %s8 = sld [smem:[#allocation0]]
  $region54: #{tpu_custom_call.1} parent=0
    _
  %s10 = ssub.s32 1, %s8
  %s11 = scalar_select 0, %s10, %s8
  $region1: #{tpu_custom_call.1} parent=0
    #allocation2 [shape = 'u8[4096]{0}', space=vmem, size = 0x1000, scoped, tag = 'input window, operand 0, single buffered']
    #allocation3 [shape = 's32[1]{0}', space=sflag, size = 0x4, scoped, tag = 'scoped memory for tpu_custom_call.1']
    #allocation4 [shape = 's32[1]{0}', space=sflag, size = 0x4, scoped, tag = 'scoped memory for tpu_custom_call.1']
    #allocation5 [shape = 'u8[16384]{0}', space=vmem, size = 0x4000, scoped, tag = 'input window, operand 1, single buffered']
    #allocation6 [shape = 's32[1]{0}', space=sflag, size = 0x4, scoped, tag = 'scoped memory for tpu_custom_call.1']
    #allocation7 [shape = 'u8[65536]{0}', space=vmem, size = 0x10000, scoped, tag = 'input window, operand 3, single buffered']
    #allocation8 [shape = 'u8[65536]{0}', space=vmem, size = 0x10000, scoped, tag = 'input window, operand 5, single buffered']
    #allocation9 [shape = 's32[1]{0}', space=sflag, size = 0x4, scoped, tag = 'scoped memory for tpu_custom_call.1']
    #allocation10 [shape = 'u8[4096]{0}', space=vmem, size = 0x1000, scoped, tag = 'output window, operand 0, single buffered']
    %12 = vsyncpa [#allocation3], 0
    %13 = vsyncpa [#allocation6], 0
    %14 = vsyncpa [#allocation9], 0
    %15 = vsyncpa [#allocation4], 0
    // Predicated region
    $region2: #{tpu_custom_call.1} parent=1 // pred_check
      _
    $region3: #{tpu_custom_call.1} parent=1 // pred_check_branch
      %17 = sbr.rel (0) target = $region5
    $region4: #{tpu_custom_call.1} parent=1 // pred_region
      %s19 = ssub.s32 128, 128
      %20 = vsyncadd [#allocation3], %s19
      %s22 = sshll.u32 [#allocation2], 4
      %s23 = int_to_ptr.vmem [resolvable:$true] %s22
      %25 = dma.hbm_to_vmem [thread:$0]  %s0, 128, %s23, [#allocation3]
    $region5: #{tpu_custom_call.1} parent=1 // pred_fallthru
      _
    // Predicated region
    $region6: #{tpu_custom_call.1} parent=1 // pred_check
      _
    $region7: #{tpu_custom_call.1} parent=1 // pred_check_branch
      %27 = sbr.rel (0) target = $region9
    $region8: #{tpu_custom_call.1} parent=1 // pred_region
      %s29 = ssub.s32 512, 512
      %30 = vsyncadd [#allocation6], %s29
      %s31 = sshll.u32 [#allocation5], 4
      %s32 = int_to_ptr.vmem [resolvable:$true] %s31
      %37 = dma.hbm_to_vmem [thread:$0]  %s1, 512, %s32, [#allocation6], 128, 128, 8
    $region9: #{tpu_custom_call.1} parent=1 // pred_fallthru
      _
    // Predicated region
    $region10: #{tpu_custom_call.1} parent=1 // pred_check
      _
    $region11: #{tpu_custom_call.1} parent=1 // pred_check_branch
      %39 = sbr.rel (0) target = $region13
    $region12: #{tpu_custom_call.1} parent=1 // pred_region
      _
    $region13: #{tpu_custom_call.1} parent=1 // pred_fallthru
      _
    // Predicated region
    $region14: #{tpu_custom_call.1} parent=1 // pred_check
      _
    $region15: #{tpu_custom_call.1} parent=1 // pred_check_branch
      %41 = sbr.rel (0) target = $region17
    $region16: #{tpu_custom_call.1} parent=1 // pred_region
      %s43 = ssub.s32 2048, 2048
      %44 = vsyncadd [#allocation6], %s43
      %s45 = sshll.u32 [#allocation7], 4
      %s46 = int_to_ptr.vmem [resolvable:$true] %s45
      %51 = dma.hbm_to_vmem [thread:$0]  %s3, 2048, %s46, [#allocation6], 128, 128, 8
    $region17: #{tpu_custom_call.1} parent=1 // pred_fallthru
      _
    // Predicated region
    $region18: #{tpu_custom_call.1} parent=1 // pred_check
      _
    $region19: #{tpu_custom_call.1} parent=1 // pred_check_branch
      %53 = sbr.rel (0) target = $region21
    $region20: #{tpu_custom_call.1} parent=1 // pred_region
      _
    $region21: #{tpu_custom_call.1} parent=1 // pred_fallthru
      _
    // Predicated region
    $region22: #{tpu_custom_call.1} parent=1 // pred_check
      _
    $region23: #{tpu_custom_call.1} parent=1 // pred_check_branch
      %55 = sbr.rel (0) target = $region25
    $region24: #{tpu_custom_call.1} parent=1 // pred_region
      %s57 = ssub.s32 2048, 2048
      %58 = vsyncadd [#allocation9], %s57
      %s59 = sshll.u32 [#allocation8], 4
      %s60 = int_to_ptr.vmem [resolvable:$true] %s59
      %65 = dma.hbm_to_vmem [thread:$0]  %s5, 2048, %s60, [#allocation9], 128, 128, 8
    $region25: #{tpu_custom_call.1} parent=1 // pred_fallthru
      _
    // Predicated region
    $region26: #{tpu_custom_call.1} parent=1 // pred_check
      _
    $region27: #{tpu_custom_call.1} parent=1 // pred_check_branch
      %67 = sbr.rel (0) target = $region29
    $region28: #{tpu_custom_call.1} parent=1 // pred_region
      _
    $region29: #{tpu_custom_call.1} parent=1 // pred_fallthru
      _
    // Predicated region
    $region30: #{tpu_custom_call.1} parent=1 // pred_check
      _
    $region31: #{tpu_custom_call.1} parent=1 // pred_check_branch
      %69 = sbr.rel (0) target = $region33
    $region32: #{tpu_custom_call.1} parent=1 // pred_region
      %70 = dma.done [#allocation3], 128
    $region33: #{tpu_custom_call.1} parent=1 // pred_fallthru
      _
    // Predicated region
    $region34: #{tpu_custom_call.1} parent=1 // pred_check
      _
    $region35: #{tpu_custom_call.1} parent=1 // pred_check_branch
      %72 = sbr.rel (0) target = $region37
    $region36: #{tpu_custom_call.1} parent=1 // pred_region
      %73 = dma.done [#allocation6], 512
    $region37: #{tpu_custom_call.1} parent=1 // pred_fallthru
      _
    // Predicated region
    $region38: #{tpu_custom_call.1} parent=1 // pred_check
      _
    $region39: #{tpu_custom_call.1} parent=1 // pred_check_branch
      %75 = sbr.rel (0) target = $region41
    $region40: #{tpu_custom_call.1} parent=1 // pred_region
      %76 = dma.done [#allocation6], 2048
    $region41: #{tpu_custom_call.1} parent=1 // pred_fallthru
      _
    // Predicated region
    $region42: #{tpu_custom_call.1} parent=1 // pred_check
      _
    $region43: #{tpu_custom_call.1} parent=1 // pred_check_branch
      %78 = sbr.rel (0) target = $region45
    $region44: #{tpu_custom_call.1} parent=1 // pred_region
      %79 = dma.done [#allocation9], 2048
    $region45: #{tpu_custom_call.1} parent=1 // pred_fallthru
      _
    %v80 = vld [vmem:[#allocation2] sm:$0xff]
    %v81 = vld [vmem:[#allocation5] sm:$0xff]
    %v82 = vld [vmem:[#allocation5 + $0x8] sm:$0xff]
    %v83 = vld [vmem:[#allocation5 + $0x10] sm:$0xff]
    %v84 = vld [vmem:[#allocation5 + $0x18] sm:$0xff]
    %v85 = vld [vmem:[%s2] sm:$0x1]
    %v87 = vlaneseq
    %v88 = vshrl.u32 %v87, 7
    %v89 = vsub.s32 0, %v88
    %v90 = vrot.slane %v85, %v89
    %vm92 = vcmask 261120
    %v94 = vsel %vm92, %v80, 0
    %96 = vmatprep.subr.mxu0 0.0
    %97 = vmatpush1.msra.mxu0 0.0
    %98 = vmatprep.subr.mxu0 0.0
    %99 = vmatpush1.msra.mxu0 0.0
    %100 = vmatprep.subr.mxu0 0.0
    %101 = vmatpush1.msra.mxu0 0.0
    %102 = vmatprep.subr.mxu0 0.0
    %103 = vmatpush1.msra.mxu0 0.0
    %104 = vmatprep.subr.mxu0 0.0
    %105 = vmatpush1.msra.mxu0 0.0
    %106 = vmatprep.subr.mxu0 0.0
    %107 = vmatpush1.msra.mxu0 0.0
    %108 = vmatprep.subr.mxu0 0.0
    %109 = vmatpush1.msra.mxu0 0.0
    %110 = vmatprep.subr.mxu0 0.0
    %111 = vmatpush1.msra.mxu0 0.0
    %112 = vmatprep.subr.mxu0 0.0
    %113 = vmatpush1.msra.mxu0 0.0
    %114 = vmatprep.subr.mxu0 0.0
    %115 = vmatpush1.msra.mxu0 0.0
    %116 = vmatprep.subr.mxu0 0.0
    %117 = vmatpush1.msra.mxu0 0.0
    %118 = vmatprep.subr.mxu0 0.0
    %119 = vmatpush1.msra.mxu0 0.0
    %120 = vmatprep.subr.mxu0 0.0
    %121 = vmatpush1.msra.mxu0 %v84
    %122 = vmatprep.subr.mxu0 0.0
    %123 = vmatpush1.msra.mxu0 %v83
    %124 = vmatprep.subr.mxu0 0.0
    %125 = vmatpush1.msra.mxu0 %v82
    %126 = vmatprep.subr.mxu0 0.0
    %127 = vmatpush1.msra.mxu0 %v81
    %128 = vmatprep.subr.mxu0 0.0
    %129 = vmatpush2.msra.mxu0 0.0
    %130 = vmatprep.subr.mxu0 0.0
    %131 = vmatpush2.msra.mxu0 0.0
    %132 = vmatprep.subr.mxu0 0.0
    %133 = vmatpush2.msra.mxu0 0.0
    %134 = vmatprep.subr.mxu0 0.0
    %135 = vmatpush2.msra.mxu0 0.0
    %136 = vmatprep.subr.mxu0 0.0
    %137 = vmatpush2.msra.mxu0 0.0
    %138 = vmatprep.subr.mxu0 0.0
    %139 = vmatpush2.msra.mxu0 0.0
    %140 = vmatprep.subr.mxu0 0.0
    %141 = vmatpush2.msra.mxu0 0.0
    %142 = vmatprep.subr.mxu0 0.0
    %143 = vmatpush2.msra.mxu0 0.0
    %144 = vmatprep.subr.mxu0 0.0
    %145 = vmatpush2.msra.mxu0 0.0
    %146 = vmatprep.subr.mxu0 0.0
    %147 = vmatpush2.msra.mxu0 0.0
    %148 = vmatprep.subr.mxu0 0.0
    %149 = vmatpush2.msra.mxu0 0.0
    %150 = vmatprep.subr.mxu0 0.0
    %151 = vmatpush2.msra.mxu0 0.0
    %152 = vmatprep.subr.mxu0 0.0
    %153 = vmatpush2.msra.mxu0 0.0
    %154 = vmatprep.subr.mxu0 0.0
    %155 = vmatpush2.msra.mxu0 0.0
    %156 = vmatprep.subr.mxu0 0.0
    %157 = vmatpush2.msra.mxu0 0.0
    %158 = vmatprep.subr.mxu0 0.0
    %159 = vmatpush2.msra.mxu0 0.0
    %160 = vmatprep.mubr.f32.mxu0 0.0
    %161 = vmatmul.mubr.f32.gmra.mxu0 %v94
    %v162 = vpop.f32.mrf.mxu0
    %v163 = vadd.f32 %v90, %v162
    %v164 = vpop.f32.mrf.mxu0
    %165 = vdwg.mxu0
    %v166 = vmax.f32 %v163, 0.0
    %v167 = vld [vmem:[#allocation7] sm:$0xff]
    %v168 = vld [vmem:[#allocation7 + $0x8] sm:$0xff]
    %v169 = vld [vmem:[#allocation7 + $0x10] sm:$0xff]
    %v170 = vld [vmem:[#allocation7 + $0x18] sm:$0xff]
    %v171 = vld [vmem:[#allocation7 + $0x20] sm:$0xff]
    %v172 = vld [vmem:[#allocation7 + $0x28] sm:$0xff]
    %v173 = vld [vmem:[#allocation7 + $0x30] sm:$0xff]
    %v174 = vld [vmem:[#allocation7 + $0x38] sm:$0xff]
    %v175 = vld [vmem:[#allocation7 + $0x40] sm:$0xff]
    %v176 = vld [vmem:[#allocation7 + $0x48] sm:$0xff]
    %v177 = vld [vmem:[#allocation7 + $0x50] sm:$0xff]
    %v178 = vld [vmem:[#allocation7 + $0x58] sm:$0xff]
    %v179 = vld [vmem:[#allocation7 + $0x60] sm:$0xff]
    %v180 = vld [vmem:[#allocation7 + $0x68] sm:$0xff]
    %v181 = vld [vmem:[#allocation7 + $0x70] sm:$0xff]
    %v182 = vld [vmem:[#allocation7 + $0x78] sm:$0xff]
    %v183 = vld [vmem:[%s4] sm:$0x1]
    %v185 = vlaneseq
    %v186 = vshrl.u32 %v185, 7
    %v187 = vsub.s32 0, %v186
    %v188 = vrot.slane %v183, %v187
    %190 = vmatprep.subr.mxu0 0.0
    %191 = vmatpush1.msra.mxu0 %v182
    %192 = vmatprep.subr.mxu0 0.0
    %193 = vmatpush1.msra.mxu0 %v181
    %194 = vmatprep.subr.mxu0 0.0
    %195 = vmatpush1.msra.mxu0 %v180
    %196 = vmatprep.subr.mxu0 0.0
    %197 = vmatpush1.msra.mxu0 %v179
    %198 = vmatprep.subr.mxu0 0.0
    %199 = vmatpush1.msra.mxu0 %v178
    %200 = vmatprep.subr.mxu0 0.0
    %201 = vmatpush1.msra.mxu0 %v177
    %202 = vmatprep.subr.mxu0 0.0
    %203 = vmatpush1.msra.mxu0 %v176
    %204 = vmatprep.subr.mxu0 0.0
    %205 = vmatpush1.msra.mxu0 %v175
    %206 = vmatprep.subr.mxu0 0.0
    %207 = vmatpush1.msra.mxu0 %v174
    %208 = vmatprep.subr.mxu0 0.0
    %209 = vmatpush1.msra.mxu0 %v173
    %210 = vmatprep.subr.mxu0 0.0
    %211 = vmatpush1.msra.mxu0 %v172
    %212 = vmatprep.subr.mxu0 0.0
    %213 = vmatpush1.msra.mxu0 %v171
    %214 = vmatprep.subr.mxu0 0.0
    %215 = vmatpush1.msra.mxu0 %v170
    %216 = vmatprep.subr.mxu0 0.0
    %217 = vmatpush1.msra.mxu0 %v169
    %218 = vmatprep.subr.mxu0 0.0
    %219 = vmatpush1.msra.mxu0 %v168
    %220 = vmatprep.subr.mxu0 0.0
    %221 = vmatpush1.msra.mxu0 %v167
    %222 = vmatprep.subr.mxu0 0.0
    %223 = vmatpush2.msra.mxu0 0.0
    %224 = vmatprep.subr.mxu0 0.0
    %225 = vmatpush2.msra.mxu0 0.0
    %226 = vmatprep.subr.mxu0 0.0
    %227 = vmatpush2.msra.mxu0 0.0
    %228 = vmatprep.subr.mxu0 0.0
    %229 = vmatpush2.msra.mxu0 0.0
    %230 = vmatprep.subr.mxu0 0.0
    %231 = vmatpush2.msra.mxu0 0.0
    %232 = vmatprep.subr.mxu0 0.0
    %233 = vmatpush2.msra.mxu0 0.0
    %234 = vmatprep.subr.mxu0 0.0
    %235 = vmatpush2.msra.mxu0 0.0
    %236 = vmatprep.subr.mxu0 0.0
    %237 = vmatpush2.msra.mxu0 0.0
    %238 = vmatprep.subr.mxu0 0.0
    %239 = vmatpush2.msra.mxu0 0.0
    %240 = vmatprep.subr.mxu0 0.0
    %241 = vmatpush2.msra.mxu0 0.0
    %242 = vmatprep.subr.mxu0 0.0
    %243 = vmatpush2.msra.mxu0 0.0
    %244 = vmatprep.subr.mxu0 0.0
    %245 = vmatpush2.msra.mxu0 0.0
    %246 = vmatprep.subr.mxu0 0.0
    %247 = vmatpush2.msra.mxu0 0.0
    %248 = vmatprep.subr.mxu0 0.0
    %249 = vmatpush2.msra.mxu0 0.0
    %250 = vmatprep.subr.mxu0 0.0
    %251 = vmatpush2.msra.mxu0 0.0
    %252 = vmatprep.subr.mxu0 0.0
    %253 = vmatpush2.msra.mxu0 0.0
    %254 = vmatprep.mubr.f32.mxu0 0.0
    %255 = vmatmul.mubr.f32.gmra.mxu0 %v166
    %v256 = vpop.f32.mrf.mxu0
    %v257 = vadd.f32 %v188, %v256
    %v258 = vpop.f32.mrf.mxu0
    %259 = vdwg.mxu0
    %v260 = vmax.f32 %v257, 0.0
    %v261 = vld [vmem:[#allocation8] sm:$0xff]
    %v262 = vld [vmem:[#allocation8 + $0x8] sm:$0xff]
    %v263 = vld [vmem:[#allocation8 + $0x10] sm:$0xff]
    %v264 = vld [vmem:[#allocation8 + $0x18] sm:$0xff]
    %v265 = vld [vmem:[#allocation8 + $0x20] sm:$0xff]
    %v266 = vld [vmem:[#allocation8 + $0x28] sm:$0xff]
    %v267 = vld [vmem:[#allocation8 + $0x30] sm:$0xff]
    %v268 = vld [vmem:[#allocation8 + $0x38] sm:$0xff]
    %v269 = vld [vmem:[#allocation8 + $0x40] sm:$0xff]
    %v270 = vld [vmem:[#allocation8 + $0x48] sm:$0xff]
    %v271 = vld [vmem:[#allocation8 + $0x50] sm:$0xff]
    %v272 = vld [vmem:[#allocation8 + $0x58] sm:$0xff]
    %v273 = vld [vmem:[#allocation8 + $0x60] sm:$0xff]
    %v274 = vld [vmem:[#allocation8 + $0x68] sm:$0xff]
    %v275 = vld [vmem:[#allocation8 + $0x70] sm:$0xff]
    %v276 = vld [vmem:[#allocation8 + $0x78] sm:$0xff]
    %v277 = vld [vmem:[%s6] sm:$0x1]
    %v279 = vlaneseq
    %v280 = vshrl.u32 %v279, 7
    %v281 = vsub.s32 0, %v280
    %v282 = vrot.slane %v277, %v281
    %284 = vmatprep.subr.mxu0 0.0
    %285 = vmatpush1.msra.mxu0 %v276
    %286 = vmatprep.subr.mxu0 0.0
    %287 = vmatpush1.msra.mxu0 %v275
    %288 = vmatprep.subr.mxu0 0.0
    %289 = vmatpush1.msra.mxu0 %v274
    %290 = vmatprep.subr.mxu0 0.0
    %291 = vmatpush1.msra.mxu0 %v273
    %292 = vmatprep.subr.mxu0 0.0
    %293 = vmatpush1.msra.mxu0 %v272
    %294 = vmatprep.subr.mxu0 0.0
    %295 = vmatpush1.msra.mxu0 %v271
    %296 = vmatprep.subr.mxu0 0.0
    %297 = vmatpush1.msra.mxu0 %v270
    %298 = vmatprep.subr.mxu0 0.0
    %299 = vmatpush1.msra.mxu0 %v269
    %300 = vmatprep.subr.mxu0 0.0
    %301 = vmatpush1.msra.mxu0 %v268
    %302 = vmatprep.subr.mxu0 0.0
    %303 = vmatpush1.msra.mxu0 %v267
    %304 = vmatprep.subr.mxu0 0.0
    %305 = vmatpush1.msra.mxu0 %v266
    %306 = vmatprep.subr.mxu0 0.0
    %307 = vmatpush1.msra.mxu0 %v265
    %308 = vmatprep.subr.mxu0 0.0
    %309 = vmatpush1.msra.mxu0 %v264
    %310 = vmatprep.subr.mxu0 0.0
    %311 = vmatpush1.msra.mxu0 %v263
    %312 = vmatprep.subr.mxu0 0.0
    %313 = vmatpush1.msra.mxu0 %v262
    %314 = vmatprep.subr.mxu0 0.0
    %315 = vmatpush1.msra.mxu0 %v261
    %316 = vmatprep.subr.mxu0 0.0
    %317 = vmatpush2.msra.mxu0 0.0
    %318 = vmatprep.subr.mxu0 0.0
    %319 = vmatpush2.msra.mxu0 0.0
    %320 = vmatprep.subr.mxu0 0.0
    %321 = vmatpush2.msra.mxu0 0.0
    %322 = vmatprep.subr.mxu0 0.0
    %323 = vmatpush2.msra.mxu0 0.0
    %324 = vmatprep.subr.mxu0 0.0
    %325 = vmatpush2.msra.mxu0 0.0
    %326 = vmatprep.subr.mxu0 0.0
    %327 = vmatpush2.msra.mxu0 0.0
    %328 = vmatprep.subr.mxu0 0.0
    %329 = vmatpush2.msra.mxu0 0.0
    %330 = vmatprep.subr.mxu0 0.0
    %331 = vmatpush2.msra.mxu0 0.0
    %332 = vmatprep.subr.mxu0 0.0
    %333 = vmatpush2.msra.mxu0 0.0
    %334 = vmatprep.subr.mxu0 0.0
    %335 = vmatpush2.msra.mxu0 0.0
    %336 = vmatprep.subr.mxu0 0.0
    %337 = vmatpush2.msra.mxu0 0.0
    %338 = vmatprep.subr.mxu0 0.0
    %339 = vmatpush2.msra.mxu0 0.0
    %340 = vmatprep.subr.mxu0 0.0
    %341 = vmatpush2.msra.mxu0 0.0
    %342 = vmatprep.subr.mxu0 0.0
    %343 = vmatpush2.msra.mxu0 0.0
    %344 = vmatprep.subr.mxu0 0.0
    %345 = vmatpush2.msra.mxu0 0.0
    %346 = vmatprep.subr.mxu0 0.0
    %347 = vmatpush2.msra.mxu0 0.0
    %348 = vmatprep.mubr.f32.mxu0 0.0
    %349 = vmatmul.mubr.f32.gmra.mxu0 %v260
    %v350 = vpop.f32.mrf.mxu0
    %v351 = vadd.f32 %v282, %v350
    %v352 = vpop.f32.mrf.mxu0
    %353 = vdwg.mxu0
    %354 = vst [vmem:[#allocation10] sm:$0xff] %v351
    // Predicated region
    $region46: #{tpu_custom_call.1} parent=1 // pred_check
      _
    $region47: #{tpu_custom_call.1} parent=1 // pred_check_branch
      %356 = sbr.rel (0) target = $region49
    $region48: #{tpu_custom_call.1} parent=1 // pred_region
      %s358 = ssub.s32 128, 128
      %359 = vsyncadd [#allocation4], %s358
      %s361 = sshll.u32 [#allocation10], 4
      %s362 = int_to_ptr.vmem [resolvable:$true] %s361
      %364 = dma.vmem_to_hbm [thread:$0]  %s362, 128, %s7, [#allocation4]
    $region49: #{tpu_custom_call.1} parent=1 // pred_fallthru
      _
    // Predicated region
    $region50: #{tpu_custom_call.1} parent=1 // pred_check
      _
    $region51: #{tpu_custom_call.1} parent=1 // pred_check_branch
      %366 = sbr.rel (0) target = $region53
    $region52: #{tpu_custom_call.1} parent=1 // pred_region
      %367 = dma.done [#allocation4], 128
    $region53: #{tpu_custom_call.1} parent=1 // pred_fallthru
      _
    %368 = vsyncpa [#allocation3], 1
    %369 = vsyncpa [#allocation6], 1
    %370 = vsyncpa [#allocation9], 1
    %371 = vsyncpa [#allocation4], 1

</llo_original>
